<compile_context>
chip_gen: v6e
topology: v6e:2x2x1
jax: 0.10.0
libtpu: 0.0.40
codegen_flags: <defaults>
</compile_context>

<pallas_src>
import jax
import jax.numpy as jnp
from jax.experimental import pallas as pl
from jax.experimental.pallas import tpu as pltpu


def linear_add_relu_kernel(x_ref, wt_ref, c_ref, o_ref):
    # x_ref:  (B, IN)
    # wt_ref: (IN, OUT)   transposed Linear weight (prepared at init time)
    # c_ref:  (1, OUT)    bias + other, pre-folded at init time
    # o_ref:  (B, OUT)
    acc = jnp.dot(x_ref[...], wt_ref[...], preferred_element_type=jnp.float32)
    o_ref[...] = jnp.maximum(acc + c_ref[...], 0.0).astype(o_ref.dtype)


def make_params(weight, bias, other):
    """One-time (init-time) parameter preparation — hoisted out of the hot path.

    weight: (OUT, IN), bias: (OUT,), other: (1, OUT)
    returns wt: (IN, OUT), combined: (1, OUT)
    """
    OUT = weight.shape[0]
    wt = jnp.asarray(weight).T                      # transpose once, stored as (IN, OUT)
    combined = bias.reshape(1, OUT) + other          # fold bias + other once
    return wt, combined


@jax.jit
def linear_add_relu(x, wt, combined):
    """x: (B, IN), wt: (IN, OUT), combined: (1, OUT) -> (B, OUT)."""
    B = x.shape[0]
    OUT = wt.shape[1]
    vmem = pltpu.MemorySpace.VMEM
    return pl.pallas_call(
        linear_add_relu_kernel,
        out_shape=jax.ShapeDtypeStruct((B, OUT), jnp.float32),
        # Gridless call: every operand is a single whole-array VMEM block.
        in_specs=[
            pl.BlockSpec(memory_space=vmem),
            pl.BlockSpec(memory_space=vmem),
            pl.BlockSpec(memory_space=vmem),
        ],
        out_specs=pl.BlockSpec(memory_space=vmem),
    )(x, wt, combined)


if __name__ == "__main__":
    key = jax.random.PRNGKey(0)
    k_x, k_w, k_b, k_o = jax.random.split(key, 4)

    B, IN, OUT = 4, 16, 32

    x = jax.random.normal(k_x, (B, IN), dtype=jnp.float32)                # X1 = randn(4, 16)
    weight = jax.random.normal(k_w, (OUT, IN), dtype=jnp.float32) * 0.1   # Linear(16, 32) weight
    bias = jax.random.normal(k_b, (OUT,), dtype=jnp.float32) * 0.1        # Linear bias
    other = jax.random.uniform(k_o, (1, OUT), dtype=jnp.float32)          # self.other = rand(1, 32)

    # Init-time prep (done once, not per call).
    wt, combined = make_params(weight, bias, other)

    out = linear_add_relu(x, wt, combined)
    out = jax.block_until_ready(out)

    # Reference check in plain JAX (original module semantics).
    ref = jnp.maximum(x @ weight.T + bias + other, 0.0)
    assert out.shape == (B, OUT)
    assert jnp.allclose(out, ref, atol=1e-5, rtol=1e-5)

    print("KERNEL_OK")
</pallas_src>

<mosaic_0001>
module attributes {stable_mosaic.version = 11 : i64} {
  func.func @linear_add_relu_kernel(%arg0: memref<4x16xf32, #tpu.memory_space<vmem>>, %arg1: memref<16x32xf32, #tpu.memory_space<vmem>>, %arg2: memref<1x32xf32, #tpu.memory_space<vmem>>, %arg3: memref<4x32xf32, #tpu.memory_space<vmem>>) attributes {dimension_semantics = [], scalar_prefetch = 0 : i64, scratch_operands = 0 : i64, tpu.core_type = #tpu.core_type<tc>} {
    %c0 = arith.constant 0 : index
    %c0_0 = arith.constant 0 : index
    %0 = vector.load %arg0[%c0, %c0_0] : memref<4x16xf32, #tpu.memory_space<vmem>>, vector<4x16xf32>
    %c0_1 = arith.constant 0 : index
    %c0_2 = arith.constant 0 : index
    %1 = vector.load %arg1[%c0_1, %c0_2] : memref<16x32xf32, #tpu.memory_space<vmem>>, vector<16x32xf32>
    %cst = arith.constant dense<0.000000e+00> : vector<4x32xf32>
    %2 = tpu.matmul %0, %1, %cst {dimension_numbers = #tpu.dot_dimension_numbers<[1], [0], [0], [1], [0, 0, 1, 1], [], []>} : vector<4x16xf32>, vector<16x32xf32>, vector<4x32xf32> -> vector<4x32xf32>
    %c0_3 = arith.constant 0 : index
    %c0_4 = arith.constant 0 : index
    %3 = vector.load %arg2[%c0_3, %c0_4] : memref<1x32xf32, #tpu.memory_space<vmem>>, vector<1x32xf32>
    %4 = vector.broadcast %3 : vector<1x32xf32> to vector<4x32xf32>
    %5 = arith.addf %2, %4 : vector<4x32xf32>
    %cst_5 = arith.constant 0.000000e+00 : f32
    %6 = vector.broadcast %cst_5 : f32 to vector<4x32xf32>
    %7 = arith.maximumf %5, %6 : vector<4x32xf32>
    %c0_6 = arith.constant 0 : index
    %c0_7 = arith.constant 0 : index
    %8 = vector.load %arg3[%c0_6, %c0_7] : memref<4x32xf32, #tpu.memory_space<vmem>>, vector<4x32xf32>
    tpu.vector_store %arg3[%c0_6, %c0_7], %7 {strides = array<i32>} : memref<4x32xf32, #tpu.memory_space<vmem>>, vector<4x32xf32>,
    return
  }
}

</mosaic_0001>

<llo_original>
// kernel: linear_add_relu.1
$region0: #{linear_add_relu.1}
  #allocation0 [shape = 'u32[]', space=smem, size = 0x4, offset = 0x4, fixed_abs, tag = 'smem constant byte address 0x4 - core index']
  #allocation1 [shape = 'u32[144,128]{1,0:T(1,128)}', space=vmem, size = 0x12000, scoped, tag = 'internal scratch']
  %s0 = inlined_call_operand.hbm [shape: f32[4,16], index: 0, kind: input, shape index: {}]
  %s1 = inlined_call_operand.hbm [shape: f32[16,32], index: 1, kind: input, shape index: {}]
  %s2 = inlined_call_operand.vmem [shape: f32[1,32], index: 2, kind: input, shape index: {}]
  %s3 = inlined_call_operand.hbm [shape: f32[4,32], index: 3, kind: output, shape index: {}]
  %s4 = sld [smem:[#allocation0]]
  $region30: #{linear_add_relu.1} parent=0
    _
  %s6 = ssub.s32 1, %s4
  %s7 = scalar_select 0, %s6, %s4
  $region1: #{linear_add_relu.1} parent=0
    #allocation2 [shape = 'u8[2048]{0}', space=vmem, size = 0x800, scoped, tag = 'input window, operand 0, single buffered']
    #allocation3 [shape = 's32[1]{0}', space=sflag, size = 0x4, scoped, tag = 'scoped memory for linear_add_relu.1']
    #allocation4 [shape = 's32[1]{0}', space=sflag, size = 0x4, scoped, tag = 'scoped memory for linear_add_relu.1']
    #allocation5 [shape = 'u8[8192]{0}', space=vmem, size = 0x2000, scoped, tag = 'input window, operand 1, single buffered']
    #allocation6 [shape = 's32[1]{0}', space=sflag, size = 0x4, scoped, tag = 'scoped memory for linear_add_relu.1']
    #allocation7 [shape = 'u8[2048]{0}', space=vmem, size = 0x800, scoped, tag = 'output window, operand 0, single buffered']
    %8 = vsyncpa [#allocation3], 0
    %9 = vsyncpa [#allocation6], 0
    %10 = vsyncpa [#allocation4], 0
    // Predicated region
    $region2: #{linear_add_relu.1} parent=1 // pred_check
      _
    $region3: #{linear_add_relu.1} parent=1 // pred_check_branch
      %12 = sbr.rel (0) target = $region5
    $region4: #{linear_add_relu.1} parent=1 // pred_region
      %s14 = ssub.s32 64, 64
      %15 = vsyncadd [#allocation3], %s14
      %s17 = sshll.u32 [#allocation2], 4
      %s18 = int_to_ptr.vmem [resolvable:$true] %s17
      %20 = dma.hbm_to_vmem [thread:$0]  %s0, 64, %s18, [#allocation3]
    $region5: #{linear_add_relu.1} parent=1 // pred_fallthru
      _
    // Predicated region
    $region6: #{linear_add_relu.1} parent=1 // pred_check
      _
    $region7: #{linear_add_relu.1} parent=1 // pred_check_branch
      %22 = sbr.rel (0) target = $region9
    $region8: #{linear_add_relu.1} parent=1 // pred_region
      %s24 = ssub.s32 256, 256
      %25 = vsyncadd [#allocation6], %s24
      %s26 = sshll.u32 [#allocation5], 4
      %s27 = int_to_ptr.vmem [resolvable:$true] %s26
      %32 = dma.hbm_to_vmem [thread:$0]  %s1, 256, %s27, [#allocation6], 128, 128, 8
    $region9: #{linear_add_relu.1} parent=1 // pred_fallthru
      _
    // Predicated region
    $region10: #{linear_add_relu.1} parent=1 // pred_check
      _
    $region11: #{linear_add_relu.1} parent=1 // pred_check_branch
      %34 = sbr.rel (0) target = $region13
    $region12: #{linear_add_relu.1} parent=1 // pred_region
      _
    $region13: #{linear_add_relu.1} parent=1 // pred_fallthru
      _
    // Predicated region
    $region14: #{linear_add_relu.1} parent=1 // pred_check
      _
    $region15: #{linear_add_relu.1} parent=1 // pred_check_branch
      %36 = sbr.rel (0) target = $region17
    $region16: #{linear_add_relu.1} parent=1 // pred_region
      %37 = dma.done [#allocation3], 64
    $region17: #{linear_add_relu.1} parent=1 // pred_fallthru
      _
    // Predicated region
    $region18: #{linear_add_relu.1} parent=1 // pred_check
      _
    $region19: #{linear_add_relu.1} parent=1 // pred_check_branch
      %39 = sbr.rel (0) target = $region21
    $region20: #{linear_add_relu.1} parent=1 // pred_region
      %40 = dma.done [#allocation6], 256
    $region21: #{linear_add_relu.1} parent=1 // pred_fallthru
      _
    %v41 = vld [vmem:[#allocation2] sm:$0xf]
    %v42 = vld [vmem:[#allocation5] sm:$0xff]
    %v43 = vld [vmem:[#allocation5 + $0x8] sm:$0xff]
    %v44 = vld [vmem:[%s2] sm:$0x1]
    %v46 = vlaneseq
    %v47 = vshrl.u32 %v46, 7
    %v48 = vsub.s32 0, %v47
    %v49 = vrot.slane %v44, %v48
    %vm51 = vcmask 130048
    %v53 = vsel %vm51, %v41, 0
    %55 = vmatprep.subr.mxu0 0.0
    %56 = vmatpush1.msra.mxu0 0.0
    %57 = vmatprep.subr.mxu0 0.0
    %58 = vmatpush1.msra.mxu0 0.0
    %59 = vmatprep.subr.mxu0 0.0
    %60 = vmatpush1.msra.mxu0 0.0
    %61 = vmatprep.subr.mxu0 0.0
    %62 = vmatpush1.msra.mxu0 0.0
    %63 = vmatprep.subr.mxu0 0.0
    %64 = vmatpush1.msra.mxu0 0.0
    %65 = vmatprep.subr.mxu0 0.0
    %66 = vmatpush1.msra.mxu0 0.0
    %67 = vmatprep.subr.mxu0 0.0
    %68 = vmatpush1.msra.mxu0 0.0
    %69 = vmatprep.subr.mxu0 0.0
    %70 = vmatpush1.msra.mxu0 0.0
    %71 = vmatprep.subr.mxu0 0.0
    %72 = vmatpush1.msra.mxu0 0.0
    %73 = vmatprep.subr.mxu0 0.0
    %74 = vmatpush1.msra.mxu0 0.0
    %75 = vmatprep.subr.mxu0 0.0
    %76 = vmatpush1.msra.mxu0 0.0
    %77 = vmatprep.subr.mxu0 0.0
    %78 = vmatpush1.msra.mxu0 0.0
    %79 = vmatprep.subr.mxu0 0.0
    %80 = vmatpush1.msra.mxu0 0.0
    %81 = vmatprep.subr.mxu0 0.0
    %82 = vmatpush1.msra.mxu0 0.0
    %83 = vmatprep.subr.mxu0 0.0
    %84 = vmatpush1.msra.mxu0 %v43
    %85 = vmatprep.subr.mxu0 0.0
    %86 = vmatpush1.msra.mxu0 %v42
    %87 = vmatprep.subr.mxu0 0.0
    %88 = vmatpush2.msra.mxu0 0.0
    %89 = vmatprep.subr.mxu0 0.0
    %90 = vmatpush2.msra.mxu0 0.0
    %91 = vmatprep.subr.mxu0 0.0
    %92 = vmatpush2.msra.mxu0 0.0
    %93 = vmatprep.subr.mxu0 0.0
    %94 = vmatpush2.msra.mxu0 0.0
    %95 = vmatprep.subr.mxu0 0.0
    %96 = vmatpush2.msra.mxu0 0.0
    %97 = vmatprep.subr.mxu0 0.0
    %98 = vmatpush2.msra.mxu0 0.0
    %99 = vmatprep.subr.mxu0 0.0
    %100 = vmatpush2.msra.mxu0 0.0
    %101 = vmatprep.subr.mxu0 0.0
    %102 = vmatpush2.msra.mxu0 0.0
    %103 = vmatprep.subr.mxu0 0.0
    %104 = vmatpush2.msra.mxu0 0.0
    %105 = vmatprep.subr.mxu0 0.0
    %106 = vmatpush2.msra.mxu0 0.0
    %107 = vmatprep.subr.mxu0 0.0
    %108 = vmatpush2.msra.mxu0 0.0
    %109 = vmatprep.subr.mxu0 0.0
    %110 = vmatpush2.msra.mxu0 0.0
    %111 = vmatprep.subr.mxu0 0.0
    %112 = vmatpush2.msra.mxu0 0.0
    %113 = vmatprep.subr.mxu0 0.0
    %114 = vmatpush2.msra.mxu0 0.0
    %115 = vmatprep.subr.mxu0 0.0
    %116 = vmatpush2.msra.mxu0 0.0
    %117 = vmatprep.subr.mxu0 0.0
    %118 = vmatpush2.msra.mxu0 0.0
    %119 = vmatprep.mubr.f32.mxu0 0.0
    %120 = vmatmul.mubr.f32.gmra.mxu0 %v53
    %v121 = vpop.f32.mrf.mxu0
    %v122 = vadd.f32 %v49, %v121
    %v123 = vpop.f32.mrf.mxu0
    %124 = vdwg.mxu0
    %v125 = vmax.f32 %v122, 0.0
    %vm126 = vcmask 257024
    %127 = vst.msk [vmem:[#allocation7] sm:$0xf] %vm126, %v125
    // Predicated region
    $region22: #{linear_add_relu.1} parent=1 // pred_check
      _
    $region23: #{linear_add_relu.1} parent=1 // pred_check_branch
      %129 = sbr.rel (0) target = $region25
    $region24: #{linear_add_relu.1} parent=1 // pred_region
      %s131 = ssub.s32 64, 64
      %132 = vsyncadd [#allocation4], %s131
      %s134 = sshll.u32 [#allocation7], 4
      %s135 = int_to_ptr.vmem [resolvable:$true] %s134
      %137 = dma.vmem_to_hbm [thread:$0]  %s135, 64, %s3, [#allocation4]
    $region25: #{linear_add_relu.1} parent=1 // pred_fallthru
      _
    // Predicated region
    $region26: #{linear_add_relu.1} parent=1 // pred_check
      _
    $region27: #{linear_add_relu.1} parent=1 // pred_check_branch
      %139 = sbr.rel (0) target = $region29
    $region28: #{linear_add_relu.1} parent=1 // pred_region
      %140 = dma.done [#allocation4], 64
    $region29: #{linear_add_relu.1} parent=1 // pred_fallthru
      _
    %141 = vsyncpa [#allocation3], 1
    %142 = vsyncpa [#allocation6], 1
    %143 = vsyncpa [#allocation4], 1

</llo_original>
